<compile_context>
chip_gen: v5e
topology: v5e:2x2
jax: 0.10.0
libtpu: 0.0.40
codegen_flags: <defaults>
</compile_context>

<pallas_src>
import jax
import jax.numpy as jnp
from jax.experimental import pallas as pl
from jax.experimental.pallas import tpu as pltpu


def _color_jitter_kernel(img_ref, mean_ref, std_ref, out_ref):
    # img_ref/out_ref: (rows, cols); mean_ref/std_ref: (rows, 1)
    inv_std = 1.0 / std_ref[...]                      # tiny (rows, 1) reciprocal
    out_ref[...] = (img_ref[...] - mean_ref[...]) * inv_std


def color_jitter_apply(img, mean, std, *, row_cap=256, col_cap=2048):
    """out = (img - mean) / std with mean/std of shape (N, C, 1, 1)."""
    N, C, H, W = img.shape
    assert mean.shape == (N, C, 1, 1) and std.shape == (N, C, 1, 1)

    nc, hw = N * C, H * W
    img2 = img.reshape(nc, hw)
    mean2 = mean.reshape(nc, 1).astype(img.dtype)
    std2 = std.reshape(nc, 1).astype(img.dtype)

    # Block sizes: either the full dim (always legal) or an (8,128)-aligned tile.
    br = nc if nc <= row_cap else row_cap             # row_cap is a multiple of 8
    bc = hw if hw <= col_cap else col_cap             # col_cap is a multiple of 128
    grid = (pl.cdiv(nc, br), pl.cdiv(hw, bc))

    out2 = pl.pallas_call(
        _color_jitter_kernel,
        out_shape=jax.ShapeDtypeStruct((nc, hw), img.dtype),
        grid_spec=pltpu.PrefetchScalarGridSpec(
            num_scalar_prefetch=0,
            grid=grid,
            in_specs=[
                pl.BlockSpec((br, bc), lambda i, j: (i, j)),   # img tile
                pl.BlockSpec((br, 1), lambda i, j: (i, 0)),    # per-(N,C) mean
                pl.BlockSpec((br, 1), lambda i, j: (i, 0)),    # per-(N,C) std
            ],
            out_specs=pl.BlockSpec((br, bc), lambda i, j: (i, j)),
        ),
        compiler_params=pltpu.CompilerParams(
            dimension_semantics=("parallel", "parallel")),
    )(img2, mean2, std2)

    return out2.reshape(N, C, H, W)


def color_jitter_shuffle(key, batch_size, mean_p=1.0, std_p=1.0):
    """JAX equivalent of ColorJitter.shuffle()."""
    k_mean, k_std = jax.random.split(key)
    mean = (jax.random.uniform(k_mean, (batch_size, 3, 1, 1),
                               dtype=jnp.float32) - 0.5) * 2.0 * mean_p
    std = jnp.exp((jax.random.uniform(k_std, (batch_size, 3, 1, 1),
                                      dtype=jnp.float32) - 0.5) * 2.0 * std_p)
    return mean, std


def color_jitter_forward(img, mean, std, *, shuffle_every=False, key=None,
                         mean_p=1.0, std_p=1.0):
    """Reproduces ColorJitter.forward (optionally re-shuffling parameters first)."""
    if shuffle_every:
        mean, std = color_jitter_shuffle(key, img.shape[0], mean_p, std_p)
    return color_jitter_apply(img, mean, std), (mean, std)


if __name__ == "__main__":
    B, C, H, W = 2, 3, 16, 16          # module hardcodes 3 channels for mean/std
    MEAN_P, STD_P = 1.0, 1.0

    key = jax.random.PRNGKey(0)
    k_img, k_shuf = jax.random.split(key)

    img = jax.random.normal(k_img, (B, C, H, W), dtype=jnp.float32)
    mean, std = color_jitter_shuffle(k_shuf, B, MEAN_P, STD_P)

    out, _ = color_jitter_forward(img, mean, std)
    out = jax.block_until_ready(out)

    # Pure-JAX reference of the module's forward for the same parameters.
    ref = (img - mean) / std
    assert out.shape == img.shape
    assert out.dtype == img.dtype
    assert jnp.allclose(out, ref, rtol=1e-5, atol=1e-6)

    print("KERNEL_OK")
</pallas_src>

<mosaic_0001>
module attributes {stable_mosaic.version = 11 : i64} {
  func.func @_color_jitter_kernel(%arg0: i32, %arg1: i32, %arg2: memref<6x256xf32, #tpu.memory_space<vmem>>, %arg3: memref<6x1xf32, #tpu.memory_space<vmem>>, %arg4: memref<6x1xf32, #tpu.memory_space<vmem>>, %arg5: memref<6x256xf32, #tpu.memory_space<vmem>>) attributes {dimension_semantics = [#tpu.dimension_semantics<parallel>, #tpu.dimension_semantics<parallel>], iteration_bounds = array<i64: 1, 1>, scalar_prefetch = 0 : i64, scratch_operands = 0 : i64, tpu.core_type = #tpu.core_type<tc>, window_params = [{transform_indices = @transform_0, window_bounds = array<i64: 6, 256>}, {transform_indices = @transform_1, window_bounds = array<i64: 6, 1>}, {transform_indices = @transform_2, window_bounds = array<i64: 6, 1>}, {transform_indices = @transform_3, window_bounds = array<i64: 6, 256>}]} {
    %c0 = arith.constant 0 : index
    %c0_0 = arith.constant 0 : index
    %0 = vector.load %arg4[%c0, %c0_0] : memref<6x1xf32, #tpu.memory_space<vmem>>, vector<6x1xf32>
    %cst = arith.constant 1.000000e+00 : f32
    %1 = vector.broadcast %cst : f32 to vector<6x1xf32>
    %2 = arith.divf %1, %0 : vector<6x1xf32>
    %c0_1 = arith.constant 0 : index
    %c0_2 = arith.constant 0 : index
    %3 = vector.load %arg2[%c0_1, %c0_2] : memref<6x256xf32, #tpu.memory_space<vmem>>, vector<6x256xf32>
    %c0_3 = arith.constant 0 : index
    %c0_4 = arith.constant 0 : index
    %4 = vector.load %arg3[%c0_3, %c0_4] : memref<6x1xf32, #tpu.memory_space<vmem>>, vector<6x1xf32>
    %5 = vector.broadcast %4 : vector<6x1xf32> to vector<6x256xf32>
    %6 = arith.subf %3, %5 : vector<6x256xf32>
    %7 = vector.broadcast %2 : vector<6x1xf32> to vector<6x256xf32>
    %8 = arith.mulf %6, %7 : vector<6x256xf32>
    %c0_5 = arith.constant 0 : index
    %c0_6 = arith.constant 0 : index
    %9 = vector.load %arg5[%c0_5, %c0_6] : memref<6x256xf32, #tpu.memory_space<vmem>>, vector<6x256xf32>
    tpu.vector_store %arg5[%c0_5, %c0_6], %8 {strides = array<i32>} : memref<6x256xf32, #tpu.memory_space<vmem>>, vector<6x256xf32>,
    return
  }
  func.func @transform_0(%arg0: i32, %arg1: i32) -> (i32, i32) {
    %c0_i32 = arith.constant 0 : i32
    return %arg0, %arg1 : i32, i32
  }
  func.func @transform_1(%arg0: i32, %arg1: i32) -> (i32, i32) {
    %c0_i32 = arith.constant 0 : i32
    %c0_i32_0 = arith.constant 0 : i32
    return %arg0, %c0_i32 : i32, i32
  }
  func.func @transform_2(%arg0: i32, %arg1: i32) -> (i32, i32) {
    %c0_i32 = arith.constant 0 : i32
    %c0_i32_0 = arith.constant 0 : i32
    return %arg0, %c0_i32 : i32, i32
  }
  func.func @transform_3(%arg0: i32, %arg1: i32) -> (i32, i32) {
    %c0_i32 = arith.constant 0 : i32
    return %arg0, %arg1 : i32, i32
  }
}

</mosaic_0001>

<llo_original>
// kernel: tpu_custom_call.1
$region0: #{tpu_custom_call.1}
  #allocation0 [shape = 'u32[]', space=smem, size = 0x4, offset = 0x4, fixed_abs, tag = 'smem constant byte address 0x4 - core index']
  #allocation1 [shape = 'u32[72,128]{1,0:T(1,128)}', space=vmem, size = 0x9000, scoped, tag = 'internal scratch']
  %s0 = inlined_call_operand.vmem [shape: f32[6,256], index: 0, kind: input, shape index: {}]
  %s1 = inlined_call_operand.vmem [shape: f32[6,1], index: 1, kind: input, shape index: {}]
  %s2 = inlined_call_operand.vmem [shape: f32[6,1], index: 2, kind: input, shape index: {}]
  %s3 = inlined_call_operand.hbm [shape: f32[6,256], index: 3, kind: output, shape index: {}]
  %s4 = sld [smem:[#allocation0]]
  $region22: #{tpu_custom_call.1} parent=0
    _
  %s6 = ssub.s32 1, %s4
  %s7 = scalar_select 0, %s6, %s4
  $region1: #{tpu_custom_call.1} parent=0
    #allocation2 [shape = 'u8[8192]{0}', space=vmem, size = 0x2000, scoped, tag = 'output window, operand 0, single buffered']
    #allocation3 [shape = 's32[1]{0}', space=sflag, size = 0x4, scoped, tag = 'scoped memory for tpu_custom_call.1']
    %8 = vsyncpa [#allocation3], 0
    // Predicated region
    $region2: #{tpu_custom_call.1} parent=1 // pred_check
      _
    $region3: #{tpu_custom_call.1} parent=1 // pred_check_branch
      %10 = sbr.rel (0) target = $region5
    $region4: #{tpu_custom_call.1} parent=1 // pred_region
      _
    $region5: #{tpu_custom_call.1} parent=1 // pred_fallthru
      _
    // Predicated region
    $region6: #{tpu_custom_call.1} parent=1 // pred_check
      _
    $region7: #{tpu_custom_call.1} parent=1 // pred_check_branch
      %12 = sbr.rel (0) target = $region9
    $region8: #{tpu_custom_call.1} parent=1 // pred_region
      _
    $region9: #{tpu_custom_call.1} parent=1 // pred_fallthru
      _
    // Predicated region
    $region10: #{tpu_custom_call.1} parent=1 // pred_check
      _
    $region11: #{tpu_custom_call.1} parent=1 // pred_check_branch
      %14 = sbr.rel (0) target = $region13
    $region12: #{tpu_custom_call.1} parent=1 // pred_region
      _
    $region13: #{tpu_custom_call.1} parent=1 // pred_fallthru
      _
    %v15 = vld [vmem:[%s2] sm:$0x3f]
    %v16 = vrcp.pop %v15
    %v17 = vmul.f32 %v15, %v16
    %v18 = vsub.f32 1.0, %v17
    %v19 = vmul.f32 %v16, %v18
    %v20 = vadd.f32 %v16, %v19
    %vm21 = vweird.f32 %v15
    %vm22 = vweird.f32 %v16
    %vm23 = vmor %vm21, %vm22
    %v24 = vsel %vm23, %v16, %v20
    %v25 = vand.u32 2147483647, %v15
    %vm26 = vcmp.eq.f32.partialorder %v25, 8.507059e+37
    %v27 = vand.u32 %v15, 2147483648
    %v28 = vor.u32 1.1754944e-38, %v27
    %v29 = vsel %vm26, %v28, %v24
    %v30 = vmul.f32 1.0, %v29
    %v31 = vld [vmem:[%s0] sm:$0x3f]
    %v32 = vld [vmem:[%s0 + $0x8] sm:$0x3f]
    %v33 = vld [vmem:[%s1] sm:$0x3f]
    %35 = vset.pattern.permute.xlu0 0
    %36 = vperm.xlu0 %35, %v33
    %v37 = vpop.permute.xlu0 %36
    %v39 = vsub.f32 %v31, %v37
    %v40 = vsub.f32 %v32, %v37
    %42 = vset.pattern.permute.xlu0 0
    %43 = vperm.xlu0 %42, %v30
    %v44 = vpop.permute.xlu0 %43
    %v46 = vmul.f32 %v39, %v44
    %v47 = vmul.f32 %v40, %v44
    %48 = vst [vmem:[#allocation2] sm:$0x3f] %v46
    %49 = vst [vmem:[#allocation2 + $0x8] sm:$0x3f] %v47
    // Predicated region
    $region14: #{tpu_custom_call.1} parent=1 // pred_check
      _
    $region15: #{tpu_custom_call.1} parent=1 // pred_check_branch
      %51 = sbr.rel (0) target = $region17
    $region16: #{tpu_custom_call.1} parent=1 // pred_region
      %53 = vsyncadd [#allocation3], 0
      %s55 = sshll.u32 [#allocation2], 4
      %s56 = int_to_ptr.vmem [resolvable:$true] %s55
      %s57 = sshll.u32 %s3, 4
      %s58 = int_to_ptr.hbm [resolvable:$true] %s57
      %60 = dma.vmem_to_hbm [thread:$0]  %s56, 256, %s58, [#allocation3]
    $region17: #{tpu_custom_call.1} parent=1 // pred_fallthru
      _
    // Predicated region
    $region18: #{tpu_custom_call.1} parent=1 // pred_check
      _
    $region19: #{tpu_custom_call.1} parent=1 // pred_check_branch
      %62 = sbr.rel (0) target = $region21
    $region20: #{tpu_custom_call.1} parent=1 // pred_region
      %64 = dma.done [#allocation3], 256
    $region21: #{tpu_custom_call.1} parent=1 // pred_fallthru
      _
    %65 = vsyncpa [#allocation3], 1

</llo_original>
